<compile_context>
chip_gen: v5e
topology: v5e:2x2
jax: 0.10.0
libtpu: 0.0.40
codegen_flags: <defaults>
</compile_context>

<pallas_src>
import jax
import jax.numpy as jnp
from jax import lax
from jax.experimental import pallas as pl
from jax.experimental.pallas import tpu as pltpu

LANE = 128


def _round_up(n, m):
    return ((n + m - 1) // m) * m


def _choose_ts(T, target=8):
    """Largest divisor of T that is <= target (timesteps per grid step)."""
    ts = min(T, target)
    while T % ts != 0:
        ts -= 1
    return ts


# ---------------------------------------------------------------------------
# Kernels
# ---------------------------------------------------------------------------

def _decoder_step_kernel(x_ref, h_ref, c_ref, wx_ref, wh_ref, b_ref,
                         wfc_ref, bfc_ref, out_ref):
    """One LSTM step + FC head.

    x_ref  : (B, I)          input (f32)
    h_ref  : (B, H)          previous hidden (f32)
    c_ref  : (B, H)          previous cell   (f32)
    wx_ref : (I, 4H)         W_ih^T   (f32 or bf16)
    wh_ref : (H, 4H)         W_hh^T   (f32 or bf16)
    b_ref  : (1, 4H)         b_ih + b_hh (f32)
    wfc_ref: (H, O_pad)      W_fc^T zero-padded to a lane multiple
    bfc_ref: (1, O_pad)
    out_ref: (B, O_pad + 2H) lane-dense slab [pred | h_new | c_new]
    """
    H = h_ref.shape[-1]
    O_pad = wfc_ref.shape[-1]
    wdt = wx_ref.dtype

    h = h_ref[...]                           # f32
    c = c_ref[...]                           # f32

    # Two MXU pushes (K=I and K=H), f32 accumulation; no dead K rows.
    gates = (jnp.dot(x_ref[...].astype(wdt), wx_ref[...],
                     preferred_element_type=jnp.float32)
             + jnp.dot(h.astype(wdt), wh_ref[...],
                       preferred_element_type=jnp.float32)
             + b_ref[...])

    # PyTorch LSTM gate order: input, forget, cell(g), output.
    # H is a multiple of 128 => each slice is a clean vreg boundary.
    i_g = jax.nn.sigmoid(gates[:, 0 * H:1 * H])
    f_g = jax.nn.sigmoid(gates[:, 1 * H:2 * H])
    g_g = jnp.tanh(gates[:, 2 * H:3 * H])
    o_g = jax.nn.sigmoid(gates[:, 3 * H:4 * H])

    c_new = f_g * c + i_g * g_g
    h_new = o_g * jnp.tanh(c_new)

    pred = jnp.dot(h_new.astype(wfc_ref.dtype), wfc_ref[...],
                   preferred_element_type=jnp.float32) + bfc_ref[...]

    # Direct slice stores into the lane-dense slab (all offsets 128-aligned).
    out_ref[:, :O_pad] = pred.astype(out_ref.dtype)
    out_ref[:, O_pad:O_pad + H] = h_new.astype(out_ref.dtype)
    out_ref[:, O_pad + H:] = c_new.astype(out_ref.dtype)


def _decoder_rollout_kernel(x_ref, h0_ref, c0_ref, wx_ref, wh_ref, b_ref,
                            wfc_ref, bfc_ref, pred_ref, h_ref, c_ref):
    """TS timesteps per grid step. Grid axis is 'arbitrary' (serial), weights
    are fetched once and stay VMEM-resident; h/c are carried in revisited
    output blocks across grid steps and in registers within a block."""
    H = h0_ref.shape[-1]
    TS = x_ref.shape[0]
    blk = pl.program_id(0)
    wdt = wx_ref.dtype

    @pl.when(blk == 0)
    def _():
        h_ref[...] = h0_ref[...]
        c_ref[...] = c0_ref[...]

    wx = wx_ref[...]
    wh = wh_ref[...]
    b = b_ref[...]
    wfc = wfc_ref[...]
    bfc = bfc_ref[...]

    def step(s, carry):
        h, c = carry                              # f32 carries
        x_t = x_ref[s]                            # (B, I) f32
        gates = (jnp.dot(x_t.astype(wdt), wx, preferred_element_type=jnp.float32)
                 + jnp.dot(h.astype(wdt), wh, preferred_element_type=jnp.float32)
                 + b)
        i_g = jax.nn.sigmoid(gates[:, 0 * H:1 * H])
        f_g = jax.nn.sigmoid(gates[:, 1 * H:2 * H])
        g_g = jnp.tanh(gates[:, 2 * H:3 * H])
        o_g = jax.nn.sigmoid(gates[:, 3 * H:4 * H])
        c_new = f_g * c + i_g * g_g
        h_new = o_g * jnp.tanh(c_new)
        pred = jnp.dot(h_new.astype(wfc.dtype), wfc,
                       preferred_element_type=jnp.float32) + bfc
        pred_ref[s] = pred.astype(pred_ref.dtype)
        return h_new, c_new

    h, c = lax.fori_loop(0, TS, step, (h_ref[...], c_ref[...]), unroll=True)

    h_ref[...] = h
    c_ref[...] = c


# ---------------------------------------------------------------------------
# One-time parameter preparation (hoisted out of the per-step call path)
# ---------------------------------------------------------------------------

def prepare_params(params, weight_dtype=jnp.bfloat16):
    """Pre-transpose / pad weights once. Default bf16 weights halve HBM weight
    traffic (accumulation stays f32 in the kernel; bias / h / c stay f32)."""
    w_ih = params["w_ih"]   # (4H, I)
    w_hh = params["w_hh"]   # (4H, H)
    w_fc = params["w_fc"]   # (O, H)
    H = w_hh.shape[1]
    I = w_ih.shape[1]
    O = w_fc.shape[0]
    O_pad = _round_up(O, LANE)

    wx = w_ih.T.astype(weight_dtype)                                   # (I, 4H)
    wh = w_hh.T.astype(weight_dtype)                                   # (H, 4H)
    wfc_t = (jnp.zeros((H, O_pad), jnp.float32)
             .at[:, :O].set(w_fc.T)).astype(weight_dtype)              # (H, O_pad)
    bfc = jnp.zeros((1, O_pad), jnp.float32).at[:, :O].set(params["b_fc"])
    bias = (params["b_ih"] + params["b_hh"]).reshape(1, 4 * H).astype(jnp.float32)

    return {"H": H, "I": I, "O": O, "O_pad": O_pad,
            "wx": wx, "wh": wh, "bias": bias, "wfc_t": wfc_t, "bfc": bfc}


# ---------------------------------------------------------------------------
# Wrappers
# ---------------------------------------------------------------------------

def decoder_forward(x, hidden, cell, prep):
    """Exact Decoder.forward semantics (eval-mode dropout).
    x: (B, I); hidden, cell: (1, B, H). Returns (pred (B,O), hidden, cell)."""
    B, I = x.shape
    H, O, O_pad = prep["H"], prep["O"], prep["O_pad"]

    h2d = hidden.reshape(B, H).astype(jnp.float32)
    c2d = cell.reshape(B, H).astype(jnp.float32)
    x32 = x.astype(jnp.float32)

    full = lambda shape: pl.BlockSpec(shape, lambda: (0,) * len(shape))

    slab = pl.pallas_call(
        _decoder_step_kernel,
        out_shape=jax.ShapeDtypeStruct((B, O_pad + 2 * H), jnp.float32),
        grid=(),
        in_specs=[
            full((B, I)),
            full((B, H)),
            full((B, H)),
            full((I, 4 * H)),
            full((H, 4 * H)),
            full((1, 4 * H)),
            full((H, O_pad)),
            full((1, O_pad)),
        ],
        out_specs=full((B, O_pad + 2 * H)),
    )(x32, h2d, c2d, prep["wx"], prep["wh"], prep["bias"],
      prep["wfc_t"], prep["bfc"])

    pred = slab[:, :O]
    h_new = slab[:, O_pad:O_pad + H]
    c_new = slab[:, O_pad + H:O_pad + 2 * H]
    return pred, h_new.reshape(1, B, H), c_new.reshape(1, B, H)


def decoder_rollout(x_seq, hidden, cell, prep, steps_per_block=8,
                    vmem_limit_bytes=None):
    """T-step decode inside ONE pallas_call. Weights VMEM-resident across all
    steps; TS timesteps per grid step amortize per-grid-step overhead.
    x_seq: (T, B, I). Returns (preds (T,B,O), hidden, cell)."""
    T, B, I = x_seq.shape
    H, O, O_pad = prep["H"], prep["O"], prep["O_pad"]
    TS = _choose_ts(T, steps_per_block)

    x32 = x_seq.astype(jnp.float32)
    h0 = hidden.reshape(B, H).astype(jnp.float32)
    c0 = cell.reshape(B, H).astype(jnp.float32)

    cp_kwargs = {"dimension_semantics": ("arbitrary",)}
    if vmem_limit_bytes is not None:
        cp_kwargs["vmem_limit_bytes"] = vmem_limit_bytes

    pred_seq, h_new, c_new = pl.pallas_call(
        _decoder_rollout_kernel,
        out_shape=(
            jax.ShapeDtypeStruct((T, B, O_pad), jnp.float32),
            jax.ShapeDtypeStruct((B, H), jnp.float32),
            jax.ShapeDtypeStruct((B, H), jnp.float32),
        ),
        grid=(T // TS,),
        in_specs=[
            pl.BlockSpec((TS, B, I), lambda t: (t, 0, 0)),
            pl.BlockSpec((B, H), lambda t: (0, 0)),
            pl.BlockSpec((B, H), lambda t: (0, 0)),
            pl.BlockSpec((I, 4 * H), lambda t: (0, 0)),      # resident across t
            pl.BlockSpec((H, 4 * H), lambda t: (0, 0)),      # resident across t
            pl.BlockSpec((1, 4 * H), lambda t: (0, 0)),
            pl.BlockSpec((H, O_pad), lambda t: (0, 0)),
            pl.BlockSpec((1, O_pad), lambda t: (0, 0)),
        ],
        out_specs=(
            pl.BlockSpec((TS, B, O_pad), lambda t: (t, 0, 0)),
            pl.BlockSpec((B, H), lambda t: (0, 0)),          # carried state
            pl.BlockSpec((B, H), lambda t: (0, 0)),
        ),
        compiler_params=pltpu.CompilerParams(**cp_kwargs),
    )(x32, h0, c0, prep["wx"], prep["wh"], prep["bias"],
      prep["wfc_t"], prep["bfc"])

    return pred_seq[:, :, :O], h_new.reshape(1, B, H), c_new.reshape(1, B, H)


# ---------------------------------------------------------------------------
# Params + pure-JAX references
# ---------------------------------------------------------------------------

def init_params(key, input_dim, hidden_dim, output_dim):
    ks = jax.random.split(key, 6)
    k = 1.0 / jnp.sqrt(hidden_dim)
    return {
        "w_ih": jax.random.uniform(ks[0], (4 * hidden_dim, input_dim), jnp.float32, -k, k),
        "w_hh": jax.random.uniform(ks[1], (4 * hidden_dim, hidden_dim), jnp.float32, -k, k),
        "b_ih": jax.random.uniform(ks[2], (4 * hidden_dim,), jnp.float32, -k, k),
        "b_hh": jax.random.uniform(ks[3], (4 * hidden_dim,), jnp.float32, -k, k),
        "w_fc": jax.random.uniform(ks[4], (output_dim, hidden_dim), jnp.float32, -k, k),
        "b_fc": jax.random.uniform(ks[5], (output_dim,), jnp.float32, -k, k),
    }


def _reference_forward(x, hidden, cell, params):
    H = hidden.shape[-1]
    h = hidden[0]
    c = cell[0]
    gates = x @ params["w_ih"].T + params["b_ih"] + h @ params["w_hh"].T + params["b_hh"]
    i_g = jax.nn.sigmoid(gates[:, 0 * H:1 * H])
    f_g = jax.nn.sigmoid(gates[:, 1 * H:2 * H])
    g_g = jnp.tanh(gates[:, 2 * H:3 * H])
    o_g = jax.nn.sigmoid(gates[:, 3 * H:4 * H])
    c_new = f_g * c + i_g * g_g
    h_new = o_g * jnp.tanh(c_new)
    pred = h_new @ params["w_fc"].T + params["b_fc"]
    return pred, h_new[None], c_new[None]


def _reference_rollout(x_seq, hidden, cell, params):
    h, c = hidden, cell
    preds = []
    for t in range(x_seq.shape[0]):
        p, h, c = _reference_forward(x_seq[t], h, c, params)
        preds.append(p)
    return jnp.stack(preds, 0), h, c


# ---------------------------------------------------------------------------
# Demo / self-check
# ---------------------------------------------------------------------------

if __name__ == "__main__":
    # Lane-friendly small shapes: H multiple of 128 so gate slices and the
    # output slab are lane-dense; B=8 fills the f32 sublane dimension.
    B, I, H, O, T = 8, 32, 128, 64, 16

    key = jax.random.PRNGKey(0)
    kx, kh, kc, kp, ks = jax.random.split(key, 5)

    x = jax.random.normal(kx, (B, I), jnp.float32)
    hidden = jax.random.normal(kh, (1, B, H), jnp.float32)
    cell = jax.random.normal(kc, (1, B, H), jnp.float32)
    x_seq = jax.random.normal(ks, (T, B, I), jnp.float32)
    params = init_params(kp, I, H, O)

    pred_r, h_r, c_r = _reference_forward(x, hidden, cell, params)

    # --- single step, f32 weights (exact-semantics check) ---
    prep_f32 = prepare_params(params, jnp.float32)
    pred, h_new, c_new = decoder_forward(x, hidden, cell, prep_f32)
    jax.block_until_ready((pred, h_new, c_new))
    assert jnp.allclose(pred, pred_r, atol=1e-4, rtol=1e-4)
    assert jnp.allclose(h_new, h_r, atol=1e-4, rtol=1e-4)
    assert jnp.allclose(c_new, c_r, atol=1e-4, rtol=1e-4)

    # --- single step, default bf16 weights (f32 accumulation), looser check ---
    prep_bf16 = prepare_params(params)          # bf16 default
    pred_b, h_b, c_b = decoder_forward(x, hidden, cell, prep_bf16)
    jax.block_until_ready((pred_b, h_b, c_b))
    assert jnp.allclose(pred_b, pred_r, atol=5e-2, rtol=5e-2)
    assert jnp.allclose(h_b, h_r, atol=5e-2, rtol=5e-2)
    assert jnp.allclose(c_b, c_r, atol=5e-2, rtol=5e-2)

    # --- T-step decode in one pallas_call, TS steps per grid step, f32 weights ---
    pred_seq, h_T, c_T = decoder_rollout(x_seq, hidden, cell, prep_f32,
                                         steps_per_block=8)
    jax.block_until_ready((pred_seq, h_T, c_T))
    pred_seq_r, h_T_r, c_T_r = _reference_rollout(x_seq, hidden, cell, params)
    assert jnp.allclose(pred_seq, pred_seq_r, atol=1e-3, rtol=1e-3)
    assert jnp.allclose(h_T, h_T_r, atol=1e-3, rtol=1e-3)
    assert jnp.allclose(c_T, c_T_r, atol=1e-3, rtol=1e-3)

    # --- bf16-weight rollout: quantization error compounds through the
    #     recurrence, so only sanity-check shape/finiteness here.
    pred_seq_b, h_T_b, c_T_b = decoder_rollout(x_seq, hidden, cell, prep_bf16,
                                               steps_per_block=8)
    jax.block_until_ready((pred_seq_b, h_T_b, c_T_b))
    assert pred_seq_b.shape == (T, B, O)
    assert bool(jnp.all(jnp.isfinite(pred_seq_b)))
    assert bool(jnp.all(jnp.isfinite(h_T_b))) and bool(jnp.all(jnp.isfinite(c_T_b)))

    print("KERNEL_OK")
</pallas_src>

<mosaic_0001>
module attributes {stable_mosaic.version = 11 : i64} {
  func.func @_decoder_step_kernel(%arg0: memref<8x32xf32, #tpu.memory_space<vmem>>, %arg1: memref<8x128xf32, #tpu.memory_space<vmem>>, %arg2: memref<8x128xf32, #tpu.memory_space<vmem>>, %arg3: memref<32x512xf32, #tpu.memory_space<vmem>>, %arg4: memref<128x512xf32, #tpu.memory_space<vmem>>, %arg5: memref<1x512xf32, #tpu.memory_space<vmem>>, %arg6: memref<128x128xf32, #tpu.memory_space<vmem>>, %arg7: memref<1x128xf32, #tpu.memory_space<vmem>>, %arg8: memref<8x384xf32, #tpu.memory_space<vmem>>) attributes {dimension_semantics = [], scalar_prefetch = 0 : i64, scratch_operands = 0 : i64, tpu.core_type = #tpu.core_type<tc>} {
    %c0 = arith.constant 0 : index
    %c0_0 = arith.constant 0 : index
    %0 = vector.load %arg1[%c0, %c0_0] : memref<8x128xf32, #tpu.memory_space<vmem>>, vector<8x128xf32>
    %c0_1 = arith.constant 0 : index
    %c0_2 = arith.constant 0 : index
    %1 = vector.load %arg2[%c0_1, %c0_2] : memref<8x128xf32, #tpu.memory_space<vmem>>, vector<8x128xf32>
    %c0_3 = arith.constant 0 : index
    %c0_4 = arith.constant 0 : index
    %2 = vector.load %arg0[%c0_3, %c0_4] : memref<8x32xf32, #tpu.memory_space<vmem>>, vector<8x32xf32>
    %c0_5 = arith.constant 0 : index
    %c0_6 = arith.constant 0 : index
    %3 = vector.load %arg3[%c0_5, %c0_6] : memref<32x512xf32, #tpu.memory_space<vmem>>, vector<32x512xf32>
    %cst = arith.constant dense<0.000000e+00> : vector<8x512xf32>
    %4 = tpu.matmul %2, %3, %cst {dimension_numbers = #tpu.dot_dimension_numbers<[1], [0], [0], [1], [0, 0, 1, 1], [], []>} : vector<8x32xf32>, vector<32x512xf32>, vector<8x512xf32> -> vector<8x512xf32>
    %c0_7 = arith.constant 0 : index
    %c0_8 = arith.constant 0 : index
    %5 = vector.load %arg4[%c0_7, %c0_8] : memref<128x512xf32, #tpu.memory_space<vmem>>, vector<128x512xf32>
    %cst_9 = arith.constant dense<0.000000e+00> : vector<8x512xf32>
    %6 = tpu.matmul %0, %5, %cst_9 {dimension_numbers = #tpu.dot_dimension_numbers<[1], [0], [0], [1], [0, 0, 1, 1], [], []>} : vector<8x128xf32>, vector<128x512xf32>, vector<8x512xf32> -> vector<8x512xf32>
    %7 = arith.addf %4, %6 : vector<8x512xf32>
    %c0_10 = arith.constant 0 : index
    %c0_11 = arith.constant 0 : index
    %8 = vector.load %arg5[%c0_10, %c0_11] : memref<1x512xf32, #tpu.memory_space<vmem>>, vector<1x512xf32>
    %9 = vector.broadcast %8 : vector<1x512xf32> to vector<8x512xf32>
    %10 = arith.addf %7, %9 : vector<8x512xf32>
    %11 = vector.extract_strided_slice %10 {offsets = [0, 0], sizes = [8, 128], strides = [1, 1]} : vector<8x512xf32> to vector<8x128xf32>
    %12 = arith.negf %11 : vector<8x128xf32>
    %13 = math.exp %12 : vector<8x128xf32>
    %cst_12 = arith.constant 1.000000e+00 : f32
    %14 = vector.broadcast %cst_12 : f32 to vector<8x128xf32>
    %15 = arith.addf %14, %13 : vector<8x128xf32>
    %16 = arith.divf %14, %15 : vector<8x128xf32>
    %17 = vector.extract_strided_slice %10 {offsets = [0, 128], sizes = [8, 128], strides = [1, 1]} : vector<8x512xf32> to vector<8x128xf32>
    %18 = arith.negf %17 : vector<8x128xf32>
    %19 = math.exp %18 : vector<8x128xf32>
    %cst_13 = arith.constant 1.000000e+00 : f32
    %20 = vector.broadcast %cst_13 : f32 to vector<8x128xf32>
    %21 = arith.addf %20, %19 : vector<8x128xf32>
    %22 = arith.divf %20, %21 : vector<8x128xf32>
    %23 = vector.extract_strided_slice %10 {offsets = [0, 256], sizes = [8, 128], strides = [1, 1]} : vector<8x512xf32> to vector<8x128xf32>
    %24 = math.tanh %23 : vector<8x128xf32>
    %25 = vector.extract_strided_slice %10 {offsets = [0, 384], sizes = [8, 128], strides = [1, 1]} : vector<8x512xf32> to vector<8x128xf32>
    %26 = arith.negf %25 : vector<8x128xf32>
    %27 = math.exp %26 : vector<8x128xf32>
    %cst_14 = arith.constant 1.000000e+00 : f32
    %28 = vector.broadcast %cst_14 : f32 to vector<8x128xf32>
    %29 = arith.addf %28, %27 : vector<8x128xf32>
    %30 = arith.divf %28, %29 : vector<8x128xf32>
    %31 = arith.mulf %22, %1 : vector<8x128xf32>
    %32 = arith.mulf %16, %24 : vector<8x128xf32>
    %33 = arith.addf %31, %32 : vector<8x128xf32>
    %34 = math.tanh %33 : vector<8x128xf32>
    %35 = arith.mulf %30, %34 : vector<8x128xf32>
    %c0_15 = arith.constant 0 : index
    %c0_16 = arith.constant 0 : index
    %36 = vector.load %arg6[%c0_15, %c0_16] : memref<128x128xf32, #tpu.memory_space<vmem>>, vector<128x128xf32>
    %cst_17 = arith.constant dense<0.000000e+00> : vector<8x128xf32>
    %37 = tpu.matmul %35, %36, %cst_17 {dimension_numbers = #tpu.dot_dimension_numbers<[1], [0], [0], [1], [0, 0, 1, 1], [], []>} : vector<8x128xf32>, vector<128x128xf32>, vector<8x128xf32> -> vector<8x128xf32>
    %c0_18 = arith.constant 0 : index
    %c0_19 = arith.constant 0 : index
    %38 = vector.load %arg7[%c0_18, %c0_19] : memref<1x128xf32, #tpu.memory_space<vmem>>, vector<1x128xf32>
    %39 = vector.broadcast %38 : vector<1x128xf32> to vector<8x128xf32>
    %40 = arith.addf %37, %39 : vector<8x128xf32>
    %c0_20 = arith.constant 0 : index
    %c0_21 = arith.constant 0 : index
    %41 = vector.load %arg8[%c0_20, %c0_21] : memref<8x384xf32, #tpu.memory_space<vmem>>, vector<8x128xf32>
    tpu.vector_store %arg8[%c0_20, %c0_21], %40 {strides = array<i32>} : memref<8x384xf32, #tpu.memory_space<vmem>>, vector<8x128xf32>,
    %c0_22 = arith.constant 0 : index
    %c128 = arith.constant 128 : index
    %42 = vector.load %arg8[%c0_22, %c128] : memref<8x384xf32, #tpu.memory_space<vmem>>, vector<8x128xf32>
    tpu.vector_store %arg8[%c0_22, %c128], %35 {strides = array<i32>} : memref<8x384xf32, #tpu.memory_space<vmem>>, vector<8x128xf32>,
    %c0_23 = arith.constant 0 : index
    %c256 = arith.constant 256 : index
    %43 = vector.load %arg8[%c0_23, %c256] : memref<8x384xf32, #tpu.memory_space<vmem>>, vector<8x128xf32>
    tpu.vector_store %arg8[%c0_23, %c256], %33 {strides = array<i32>} : memref<8x384xf32, #tpu.memory_space<vmem>>, vector<8x128xf32>,
    return
  }
}

</mosaic_0001>

<llo_original>
// kernel: tpu_custom_call.1
$region0: #{tpu_custom_call.1}
  #allocation0 [shape = 'u32[]', space=smem, size = 0x4, offset = 0x4, fixed_abs, tag = 'smem constant byte address 0x4 - core index']
  #allocation1 [shape = 'u32[72,128]{1,0:T(1,128)}', space=vmem, size = 0x9000, scoped, tag = 'internal scratch']
  %s0 = inlined_call_operand.hbm [shape: f32[8,32], index: 0, kind: input, shape index: {}]
  %s1 = inlined_call_operand.hbm [shape: f32[8,128], index: 1, kind: input, shape index: {}]
  %s2 = inlined_call_operand.hbm [shape: f32[8,128], index: 2, kind: input, shape index: {}]
  %s3 = inlined_call_operand.hbm [shape: f32[32,512], index: 3, kind: input, shape index: {}]
  %s4 = inlined_call_operand.hbm [shape: f32[128,512], index: 4, kind: input, shape index: {}]
  %s5 = inlined_call_operand.vmem [shape: f32[1,512], index: 5, kind: input, shape index: {}]
  %s6 = inlined_call_operand.hbm [shape: f32[128,128], index: 6, kind: input, shape index: {}]
  %s7 = inlined_call_operand.vmem [shape: f32[1,128], index: 7, kind: input, shape index: {}]
  %s8 = inlined_call_operand.hbm [shape: f32[8,384], index: 8, kind: output, shape index: {}]
  %s9 = sld [smem:[#allocation0]]
  $region66: #{tpu_custom_call.1} parent=0
    _
  %s11 = ssub.s32 1, %s9
  %s12 = scalar_select 0, %s11, %s9
  $region1: #{tpu_custom_call.1} parent=0
    #allocation2 [shape = 'u8[4096]{0}', space=vmem, size = 0x1000, scoped, tag = 'input window, operand 0, single buffered']
    #allocation3 [shape = 's32[1]{0}', space=sflag, size = 0x4, scoped, tag = 'scoped memory for tpu_custom_call.1']
    #allocation4 [shape = 's32[1]{0}', space=sflag, size = 0x4, scoped, tag = 'scoped memory for tpu_custom_call.1']
    #allocation5 [shape = 'u8[4096]{0}', space=vmem, size = 0x1000, scoped, tag = 'input window, operand 1, single buffered']
    #allocation6 [shape = 's32[1]{0}', space=sflag, size = 0x4, scoped, tag = 'scoped memory for tpu_custom_call.1']
    #allocation7 [shape = 'u8[4096]{0}', space=vmem, size = 0x1000, scoped, tag = 'input window, operand 2, single buffered']
    #allocation8 [shape = 'u8[65536]{0}', space=vmem, size = 0x10000, scoped, tag = 'input window, operand 3, single buffered']
    #allocation9 [shape = 's32[1]{0}', space=sflag, size = 0x4, scoped, tag = 'scoped memory for tpu_custom_call.1']
    #allocation10 [shape = 'u8[262144]{0}', space=vmem, size = 0x40000, scoped, tag = 'input window, operand 4, single buffered']
    #allocation11 [shape = 'u8[65536]{0}', space=vmem, size = 0x10000, scoped, tag = 'input window, operand 6, single buffered']
    #allocation12 [shape = 's32[1]{0}', space=sflag, size = 0x4, scoped, tag = 'scoped memory for tpu_custom_call.1']
    #allocation13 [shape = 'u8[12288]{0}', space=vmem, size = 0x3000, scoped, tag = 'output window, operand 0, single buffered']
    %13 = vsyncpa [#allocation3], 0
    %14 = vsyncpa [#allocation6], 0
    %15 = vsyncpa [#allocation9], 0
    %16 = vsyncpa [#allocation12], 0
    %17 = vsyncpa [#allocation4], 0
    // Predicated region
    $region2: #{tpu_custom_call.1} parent=1 // pred_check
      _
    $region3: #{tpu_custom_call.1} parent=1 // pred_check_branch
      %19 = sbr.rel (0) target = $region5
    $region4: #{tpu_custom_call.1} parent=1 // pred_region
      %21 = vsyncadd [#allocation3], 0
      %s23 = sshll.u32 %s0, 4
      %s24 = int_to_ptr.hbm [resolvable:$true] %s23
      %s25 = sshll.u32 [#allocation2], 4
      %s26 = int_to_ptr.vmem [resolvable:$true] %s25
      %28 = dma.hbm_to_vmem [thread:$0]  %s24, 128, %s26, [#allocation3]
    $region5: #{tpu_custom_call.1} parent=1 // pred_fallthru
      _
    // Predicated region
    $region6: #{tpu_custom_call.1} parent=1 // pred_check
      _
    $region7: #{tpu_custom_call.1} parent=1 // pred_check_branch
      %30 = sbr.rel (0) target = $region9
    $region8: #{tpu_custom_call.1} parent=1 // pred_region
      %32 = vsyncadd [#allocation6], 0
      %s34 = sshll.u32 %s1, 4
      %s35 = int_to_ptr.hbm [resolvable:$true] %s34
      %s36 = sshll.u32 [#allocation5], 4
      %s37 = int_to_ptr.vmem [resolvable:$true] %s36
      %39 = dma.hbm_to_vmem [thread:$0]  %s35, 128, %s37, [#allocation6]
    $region9: #{tpu_custom_call.1} parent=1 // pred_fallthru
      _
    // Predicated region
    $region10: #{tpu_custom_call.1} parent=1 // pred_check
      _
    $region11: #{tpu_custom_call.1} parent=1 // pred_check_branch
      %41 = sbr.rel (0) target = $region13
    $region12: #{tpu_custom_call.1} parent=1 // pred_region
      %43 = vsyncadd [#allocation6], 0
      %s45 = sshll.u32 %s2, 4
      %s46 = int_to_ptr.hbm [resolvable:$true] %s45
      %s47 = sshll.u32 [#allocation7], 4
      %s48 = int_to_ptr.vmem [resolvable:$true] %s47
      %50 = dma.hbm_to_vmem [thread:$0]  %s46, 128, %s48, [#allocation6]
    $region13: #{tpu_custom_call.1} parent=1 // pred_fallthru
      _
    // Predicated region
    $region14: #{tpu_custom_call.1} parent=1 // pred_check
      _
    $region15: #{tpu_custom_call.1} parent=1 // pred_check_branch
      %52 = sbr.rel (0) target = $region17
    $region16: #{tpu_custom_call.1} parent=1 // pred_region
      %54 = vsyncadd [#allocation9], 0
      %s55 = sshll.u32 %s3, 4
      %s56 = int_to_ptr.hbm [resolvable:$true] %s55
      %s57 = sshll.u32 [#allocation8], 4
      %s58 = int_to_ptr.vmem [resolvable:$true] %s57
      %63 = dma.hbm_to_vmem [thread:$0]  %s56, 2048, %s58, [#allocation9], 512, 512, 32
    $region17: #{tpu_custom_call.1} parent=1 // pred_fallthru
      _
    // Predicated region
    $region18: #{tpu_custom_call.1} parent=1 // pred_check
      _
    $region19: #{tpu_custom_call.1} parent=1 // pred_check_branch
      %65 = sbr.rel (0) target = $region21
    $region20: #{tpu_custom_call.1} parent=1 // pred_region
      %67 = vsyncadd [#allocation9], 0
      %s68 = sshll.u32 %s4, 4
      %s69 = int_to_ptr.hbm [resolvable:$true] %s68
      %s70 = sshll.u32 [#allocation10], 4
      %s71 = int_to_ptr.vmem [resolvable:$true] %s70
      %76 = dma.hbm_to_vmem [thread:$0]  %s69, 8192, %s71, [#allocation9], 512, 512, 32
    $region21: #{tpu_custom_call.1} parent=1 // pred_fallthru
      _
    // Predicated region
    $region22: #{tpu_custom_call.1} parent=1 // pred_check
      _
    $region23: #{tpu_custom_call.1} parent=1 // pred_check_branch
      %78 = sbr.rel (0) target = $region25
    $region24: #{tpu_custom_call.1} parent=1 // pred_region
      _
    $region25: #{tpu_custom_call.1} parent=1 // pred_fallthru
      _
    // Predicated region
    $region26: #{tpu_custom_call.1} parent=1 // pred_check
      _
    $region27: #{tpu_custom_call.1} parent=1 // pred_check_branch
      %80 = sbr.rel (0) target = $region29
    $region28: #{tpu_custom_call.1} parent=1 // pred_region
      %82 = vsyncadd [#allocation12], 0
      %s83 = sshll.u32 %s6, 4
      %s84 = int_to_ptr.hbm [resolvable:$true] %s83
      %s85 = sshll.u32 [#allocation11], 4
      %s86 = int_to_ptr.vmem [resolvable:$true] %s85
      %91 = dma.hbm_to_vmem [thread:$0]  %s84, 2048, %s86, [#allocation12], 128, 128, 8
    $region29: #{tpu_custom_call.1} parent=1 // pred_fallthru
      _
    // Predicated region
    $region30: #{tpu_custom_call.1} parent=1 // pred_check
      _
    $region31: #{tpu_custom_call.1} parent=1 // pred_check_branch
      %93 = sbr.rel (0) target = $region33
    $region32: #{tpu_custom_call.1} parent=1 // pred_region
      _
    $region33: #{tpu_custom_call.1} parent=1 // pred_fallthru
      _
    // Predicated region
    $region34: #{tpu_custom_call.1} parent=1 // pred_check
      _
    $region35: #{tpu_custom_call.1} parent=1 // pred_check_branch
      %95 = sbr.rel (0) target = $region37
    $region36: #{tpu_custom_call.1} parent=1 // pred_region
      %97 = dma.done [#allocation3], 128
    $region37: #{tpu_custom_call.1} parent=1 // pred_fallthru
      _
    // Predicated region
    $region38: #{tpu_custom_call.1} parent=1 // pred_check
      _
    $region39: #{tpu_custom_call.1} parent=1 // pred_check_branch
      %99 = sbr.rel (0) target = $region41
    $region40: #{tpu_custom_call.1} parent=1 // pred_region
      %101 = dma.done [#allocation6], 128
    $region41: #{tpu_custom_call.1} parent=1 // pred_fallthru
      _
    // Predicated region
    $region42: #{tpu_custom_call.1} parent=1 // pred_check
      _
    $region43: #{tpu_custom_call.1} parent=1 // pred_check_branch
      %103 = sbr.rel (0) target = $region45
    $region44: #{tpu_custom_call.1} parent=1 // pred_region
      %105 = dma.done [#allocation6], 128
    $region45: #{tpu_custom_call.1} parent=1 // pred_fallthru
      _
    // Predicated region
    $region46: #{tpu_custom_call.1} parent=1 // pred_check
      _
    $region47: #{tpu_custom_call.1} parent=1 // pred_check_branch
      %107 = sbr.rel (0) target = $region49
    $region48: #{tpu_custom_call.1} parent=1 // pred_region
      %109 = dma.done [#allocation9], 2048
    $region49: #{tpu_custom_call.1} parent=1 // pred_fallthru
      _
    // Predicated region
    $region50: #{tpu_custom_call.1} parent=1 // pred_check
      _
    $region51: #{tpu_custom_call.1} parent=1 // pred_check_branch
      %111 = sbr.rel (0) target = $region53
    $region52: #{tpu_custom_call.1} parent=1 // pred_region
      %113 = dma.done [#allocation9], 8192
    $region53: #{tpu_custom_call.1} parent=1 // pred_fallthru
      _
    // Predicated region
    $region54: #{tpu_custom_call.1} parent=1 // pred_check
      _
    $region55: #{tpu_custom_call.1} parent=1 // pred_check_branch
      %115 = sbr.rel (0) target = $region57
    $region56: #{tpu_custom_call.1} parent=1 // pred_region
      %117 = dma.done [#allocation12], 2048
    $region57: #{tpu_custom_call.1} parent=1 // pred_fallthru
      _
    %v118 = vld [vmem:[#allocation5] sm:$0xff]
    %v119 = vld [vmem:[#allocation7] sm:$0xff]
    %v120 = vld [vmem:[#allocation2] sm:$0xff]
    %v121 = vld [vmem:[#allocation8] sm:$0xff]
    %v122 = vld [vmem:[#allocation8 + $0x8] sm:$0xff]
    %v123 = vld [vmem:[#allocation8 + $0x10] sm:$0xff]
    %v124 = vld [vmem:[#allocation8 + $0x18] sm:$0xff]
    %v125 = vld [vmem:[#allocation8 + $0x20] sm:$0xff]
    %v126 = vld [vmem:[#allocation8 + $0x28] sm:$0xff]
    %v127 = vld [vmem:[#allocation8 + $0x30] sm:$0xff]
    %v128 = vld [vmem:[#allocation8 + $0x38] sm:$0xff]
    %v129 = vld [vmem:[#allocation8 + $0x40] sm:$0xff]
    %v130 = vld [vmem:[#allocation8 + $0x48] sm:$0xff]
    %v131 = vld [vmem:[#allocation8 + $0x50] sm:$0xff]
    %v132 = vld [vmem:[#allocation8 + $0x58] sm:$0xff]
    %v133 = vld [vmem:[#allocation8 + $0x60] sm:$0xff]
    %v134 = vld [vmem:[#allocation8 + $0x68] sm:$0xff]
    %v135 = vld [vmem:[#allocation8 + $0x70] sm:$0xff]
    %v136 = vld [vmem:[#allocation8 + $0x78] sm:$0xff]
    %v137 = vld [vmem:[#allocation10] sm:$0xff]
    %v138 = vld [vmem:[#allocation10 + $0x8] sm:$0xff]
    %v139 = vld [vmem:[#allocation10 + $0x10] sm:$0xff]
    %v140 = vld [vmem:[#allocation10 + $0x18] sm:$0xff]
    %v141 = vld [vmem:[#allocation10 + $0x20] sm:$0xff]
    %v142 = vld [vmem:[#allocation10 + $0x28] sm:$0xff]
    %v143 = vld [vmem:[#allocation10 + $0x30] sm:$0xff]
    %v144 = vld [vmem:[#allocation10 + $0x38] sm:$0xff]
    %v145 = vld [vmem:[#allocation10 + $0x40] sm:$0xff]
    %v146 = vld [vmem:[#allocation10 + $0x48] sm:$0xff]
    %v147 = vld [vmem:[#allocation10 + $0x50] sm:$0xff]
    %v148 = vld [vmem:[#allocation10 + $0x58] sm:$0xff]
    %v149 = vld [vmem:[#allocation10 + $0x60] sm:$0xff]
    %v150 = vld [vmem:[#allocation10 + $0x68] sm:$0xff]
    %v151 = vld [vmem:[#allocation10 + $0x70] sm:$0xff]
    %v152 = vld [vmem:[#allocation10 + $0x78] sm:$0xff]
    %v153 = vld [vmem:[#allocation10 + $0x80] sm:$0xff]
    %v154 = vld [vmem:[#allocation10 + $0x88] sm:$0xff]
    %v155 = vld [vmem:[#allocation10 + $0x90] sm:$0xff]
    %v156 = vld [vmem:[#allocation10 + $0x98] sm:$0xff]
    %v157 = vld [vmem:[#allocation10 + $0xa0] sm:$0xff]
    %v158 = vld [vmem:[#allocation10 + $0xa8] sm:$0xff]
    %v159 = vld [vmem:[#allocation10 + $0xb0] sm:$0xff]
    %v160 = vld [vmem:[#allocation10 + $0xb8] sm:$0xff]
    %v161 = vld [vmem:[#allocation10 + $0xc0] sm:$0xff]
    %v162 = vld [vmem:[#allocation10 + $0xc8] sm:$0xff]
    %v163 = vld [vmem:[#allocation10 + $0xd0] sm:$0xff]
    %v164 = vld [vmem:[#allocation10 + $0xd8] sm:$0xff]
    %v165 = vld [vmem:[#allocation10 + $0xe0] sm:$0xff]
    %v166 = vld [vmem:[#allocation10 + $0xe8] sm:$0xff]
    %v167 = vld [vmem:[#allocation10 + $0xf0] sm:$0xff]
    %v168 = vld [vmem:[#allocation10 + $0xf8] sm:$0xff]
    %v169 = vld [vmem:[#allocation10 + $0x100] sm:$0xff]
    %v170 = vld [vmem:[#allocation10 + $0x108] sm:$0xff]
    %v171 = vld [vmem:[#allocation10 + $0x110] sm:$0xff]
    %v172 = vld [vmem:[#allocation10 + $0x118] sm:$0xff]
    %v173 = vld [vmem:[#allocation10 + $0x120] sm:$0xff]
    %v174 = vld [vmem:[#allocation10 + $0x128] sm:$0xff]
    %v175 = vld [vmem:[#allocation10 + $0x130] sm:$0xff]
    %v176 = vld [vmem:[#allocation10 + $0x138] sm:$0xff]
    %v177 = vld [vmem:[#allocation10 + $0x140] sm:$0xff]
    %v178 = vld [vmem:[#allocation10 + $0x148] sm:$0xff]
    %v179 = vld [vmem:[#allocation10 + $0x150] sm:$0xff]
    %v180 = vld [vmem:[#allocation10 + $0x158] sm:$0xff]
    %v181 = vld [vmem:[#allocation10 + $0x160] sm:$0xff]
    %v182 = vld [vmem:[#allocation10 + $0x168] sm:$0xff]
    %v183 = vld [vmem:[#allocation10 + $0x170] sm:$0xff]
    %v184 = vld [vmem:[#allocation10 + $0x178] sm:$0xff]
    %v185 = vld [vmem:[#allocation10 + $0x180] sm:$0xff]
    %v186 = vld [vmem:[#allocation10 + $0x188] sm:$0xff]
    %v187 = vld [vmem:[#allocation10 + $0x190] sm:$0xff]
    %v188 = vld [vmem:[#allocation10 + $0x198] sm:$0xff]
    %v189 = vld [vmem:[#allocation10 + $0x1a0] sm:$0xff]
    %v190 = vld [vmem:[#allocation10 + $0x1a8] sm:$0xff]
    %v191 = vld [vmem:[#allocation10 + $0x1b0] sm:$0xff]
    %v192 = vld [vmem:[#allocation10 + $0x1b8] sm:$0xff]
    %v193 = vld [vmem:[#allocation10 + $0x1c0] sm:$0xff]
    %v194 = vld [vmem:[#allocation10 + $0x1c8] sm:$0xff]
    %v195 = vld [vmem:[#allocation10 + $0x1d0] sm:$0xff]
    %v196 = vld [vmem:[#allocation10 + $0x1d8] sm:$0xff]
    %v197 = vld [vmem:[#allocation10 + $0x1e0] sm:$0xff]
    %v198 = vld [vmem:[#allocation10 + $0x1e8] sm:$0xff]
    %v199 = vld [vmem:[#allocation10 + $0x1f0] sm:$0xff]
    %v200 = vld [vmem:[#allocation10 + $0x1f8] sm:$0xff]
    %201 = vmatpush.msra.mxu0 %v197
    %202 = vmatpush.msra.mxu0 %v193
    %203 = vmatpush.msra.mxu0 %v189
    %204 = vmatpush.msra.mxu0 %v185
    %205 = vmatpush.msra.mxu0 %v181
    %206 = vmatpush.msra.mxu0 %v177
    %207 = vmatpush.msra.mxu0 %v173
    %208 = vmatpush.msra.mxu0 %v169
    %209 = vmatpush.msra.mxu0 %v165
    %210 = vmatpush.msra.mxu0 %v161
    %211 = vmatpush.msra.mxu0 %v157
    %212 = vmatpush.msra.mxu0 %v153
    %213 = vmatpush.msra.mxu0 %v149
    %214 = vmatpush.msra.mxu0 %v145
    %215 = vmatpush.msra.mxu0 %v141
    %216 = vmatpush.msra.mxu0 %v137
    %217 = vmatmul.f32.gmra.mxu0 %v118
    %v218 = vpop.f32.mrf.mxu0
    %v219 = vadd.f32 0.0, %v218
    %220 = vdwg.mxu0
    %221 = vmatpush.msra.mxu0 %v198
    %222 = vmatpush.msra.mxu0 %v194
    %223 = vmatpush.msra.mxu0 %v190
    %224 = vmatpush.msra.mxu0 %v186
    %225 = vmatpush.msra.mxu0 %v182
    %226 = vmatpush.msra.mxu0 %v178
    %227 = vmatpush.msra.mxu0 %v174
    %228 = vmatpush.msra.mxu0 %v170
    %229 = vmatpush.msra.mxu0 %v166
    %230 = vmatpush.msra.mxu0 %v162
    %231 = vmatpush.msra.mxu0 %v158
    %232 = vmatpush.msra.mxu0 %v154
    %233 = vmatpush.msra.mxu0 %v150
    %234 = vmatpush.msra.mxu0 %v146
    %235 = vmatpush.msra.mxu0 %v142
    %236 = vmatpush.msra.mxu0 %v138
    %237 = vmatmul.f32.gmra.mxu0 %v118
    %v238 = vpop.f32.mrf.mxu0
    %v239 = vadd.f32 0.0, %v238
    %240 = vdwg.mxu0
    %241 = vmatpush.msra.mxu0 %v199
    %242 = vmatpush.msra.mxu0 %v195
    %243 = vmatpush.msra.mxu0 %v191
    %244 = vmatpush.msra.mxu0 %v187
    %245 = vmatpush.msra.mxu0 %v183
    %246 = vmatpush.msra.mxu0 %v179
    %247 = vmatpush.msra.mxu0 %v175
    %248 = vmatpush.msra.mxu0 %v171
    %249 = vmatpush.msra.mxu0 %v167
    %250 = vmatpush.msra.mxu0 %v163
    %251 = vmatpush.msra.mxu0 %v159
    %252 = vmatpush.msra.mxu0 %v155
    %253 = vmatpush.msra.mxu0 %v151
    %254 = vmatpush.msra.mxu0 %v147
    %255 = vmatpush.msra.mxu0 %v143
    %256 = vmatpush.msra.mxu0 %v139
    %257 = vmatmul.f32.gmra.mxu0 %v118
    %v258 = vpop.f32.mrf.mxu0
    %v259 = vadd.f32 0.0, %v258
    %260 = vdwg.mxu0
    %261 = vmatpush.msra.mxu0 %v200
    %262 = vmatpush.msra.mxu0 %v196
    %263 = vmatpush.msra.mxu0 %v192
    %264 = vmatpush.msra.mxu0 %v188
    %265 = vmatpush.msra.mxu0 %v184
    %266 = vmatpush.msra.mxu0 %v180
    %267 = vmatpush.msra.mxu0 %v176
    %268 = vmatpush.msra.mxu0 %v172
    %269 = vmatpush.msra.mxu0 %v168
    %270 = vmatpush.msra.mxu0 %v164
    %271 = vmatpush.msra.mxu0 %v160
    %272 = vmatpush.msra.mxu0 %v156
    %273 = vmatpush.msra.mxu0 %v152
    %274 = vmatpush.msra.mxu0 %v148
    %275 = vmatpush.msra.mxu0 %v144
    %276 = vmatpush.msra.mxu0 %v140
    %277 = vmatmul.f32.gmra.mxu0 %v118
    %v278 = vpop.f32.mrf.mxu0
    %v279 = vadd.f32 0.0, %v278
    %280 = vdwg.mxu0
    %vm281 = vcmask 261120
    %v283 = vsel %vm281, %v120, 0
    %285 = vmatpush.msra.mxu0 0.0
    %286 = vmatpush.msra.mxu0 0.0
    %287 = vmatpush.msra.mxu0 0.0
    %288 = vmatpush.msra.mxu0 0.0
    %289 = vmatpush.msra.mxu0 0.0
    %290 = vmatpush.msra.mxu0 0.0
    %291 = vmatpush.msra.mxu0 0.0
    %292 = vmatpush.msra.mxu0 0.0
    %293 = vmatpush.msra.mxu0 0.0
    %294 = vmatpush.msra.mxu0 0.0
    %295 = vmatpush.msra.mxu0 0.0
    %296 = vmatpush.msra.mxu0 0.0
    %297 = vmatpush.msra.mxu0 %v133
    %298 = vmatpush.msra.mxu0 %v129
    %299 = vmatpush.msra.mxu0 %v125
    %300 = vmatpush.msra.mxu0 %v121
    %301 = vmatmul.f32.gmra.mxu0 %v283
    %v302 = vpop.f32.mrf.mxu0
    %v303 = vadd.f32 %v219, %v302
    %304 = vdwg.mxu0
    %305 = vmatpush.msra.mxu0 0.0
    %306 = vmatpush.msra.mxu0 0.0
    %307 = vmatpush.msra.mxu0 0.0
    %308 = vmatpush.msra.mxu0 0.0
    %309 = vmatpush.msra.mxu0 0.0
    %310 = vmatpush.msra.mxu0 0.0
    %311 = vmatpush.msra.mxu0 0.0
    %312 = vmatpush.msra.mxu0 0.0
    %313 = vmatpush.msra.mxu0 0.0
    %314 = vmatpush.msra.mxu0 0.0
    %315 = vmatpush.msra.mxu0 0.0
    %316 = vmatpush.msra.mxu0 0.0
    %317 = vmatpush.msra.mxu0 %v134
    %318 = vmatpush.msra.mxu0 %v130
    %319 = vmatpush.msra.mxu0 %v126
    %320 = vmatpush.msra.mxu0 %v122
    %321 = vmatmul.f32.gmra.mxu0 %v283
    %v322 = vpop.f32.mrf.mxu0
    %v323 = vadd.f32 %v239, %v322
    %324 = vdwg.mxu0
    %325 = vmatpush.msra.mxu0 0.0
    %326 = vmatpush.msra.mxu0 0.0
    %327 = vmatpush.msra.mxu0 0.0
    %328 = vmatpush.msra.mxu0 0.0
    %329 = vmatpush.msra.mxu0 0.0
    %330 = vmatpush.msra.mxu0 0.0
    %331 = vmatpush.msra.mxu0 0.0
    %332 = vmatpush.msra.mxu0 0.0
    %333 = vmatpush.msra.mxu0 0.0
    %334 = vmatpush.msra.mxu0 0.0
    %335 = vmatpush.msra.mxu0 0.0
    %336 = vmatpush.msra.mxu0 0.0
    %337 = vmatpush.msra.mxu0 %v135
    %338 = vmatpush.msra.mxu0 %v131
    %339 = vmatpush.msra.mxu0 %v127
    %340 = vmatpush.msra.mxu0 %v123
    %341 = vmatmul.f32.gmra.mxu0 %v283
    %v342 = vpop.f32.mrf.mxu0
    %v343 = vadd.f32 %v259, %v342
    %344 = vdwg.mxu0
    %345 = vmatpush.msra.mxu0 0.0
    %346 = vmatpush.msra.mxu0 0.0
    %347 = vmatpush.msra.mxu0 0.0
    %348 = vmatpush.msra.mxu0 0.0
    %349 = vmatpush.msra.mxu0 0.0
    %350 = vmatpush.msra.mxu0 0.0
    %351 = vmatpush.msra.mxu0 0.0
    %352 = vmatpush.msra.mxu0 0.0
    %353 = vmatpush.msra.mxu0 0.0
    %354 = vmatpush.msra.mxu0 0.0
    %355 = vmatpush.msra.mxu0 0.0
    %356 = vmatpush.msra.mxu0 0.0
    %357 = vmatpush.msra.mxu0 %v136
    %358 = vmatpush.msra.mxu0 %v132
    %359 = vmatpush.msra.mxu0 %v128
    %360 = vmatpush.msra.mxu0 %v124
    %361 = vmatmul.f32.gmra.mxu0 %v283
    %v362 = vpop.f32.mrf.mxu0
    %v363 = vadd.f32 %v279, %v362
    %364 = vdwg.mxu0
    %v365 = vld [vmem:[%s5] sm:$0xf]
    %v367 = vperm.slane %v365, 0
    %v368 = vperm.slane %v365, 1
    %v369 = vperm.slane %v365, 2
    %v370 = vperm.slane %v365, 3
    %v375 = vadd.f32 %v303, %v367
    %v376 = vadd.f32 %v323, %v368
    %v377 = vadd.f32 %v343, %v369
    %v378 = vadd.f32 %v363, %v370
    %v379 = vxor.u32 %v375, 2147483648
    %v380 = vmul.f32 %v379, 1.442695
    %v381 = vpow.pop %v380
    %v382 = vadd.f32 %v381, 1.0
    %v383 = vrcp.pop %v382
    %v384 = vmul.f32 %v382, %v383
    %v385 = vsub.f32 1.0, %v384
    %v386 = vmul.f32 %v383, %v385
    %v387 = vadd.f32 %v383, %v386
    %vm388 = vweird.f32 %v382
    %vm389 = vweird.f32 %v383
    %vm390 = vmor %vm388, %vm389
    %v391 = vsel %vm390, %v383, %v387
    %v392 = vand.u32 2147483647, %v382
    %vm393 = vcmp.eq.f32.partialorder %v392, 8.507059e+37
    %v394 = vand.u32 %v382, 2147483648
    %v395 = vor.u32 1.1754944e-38, %v394
    %v396 = vsel %vm393, %v395, %v391
    %v397 = vmul.f32 1.0, %v396
    %v398 = vxor.u32 %v376, 2147483648
    %v399 = vmul.f32 %v398, 1.442695
    %v400 = vpow.pop %v399
    %v401 = vadd.f32 %v400, 1.0
    %v402 = vrcp.pop %v401
    %v403 = vmul.f32 %v401, %v402
    %v404 = vsub.f32 1.0, %v403
    %v405 = vmul.f32 %v402, %v404
    %v406 = vadd.f32 %v402, %v405
    %vm407 = vweird.f32 %v401
    %vm408 = vweird.f32 %v402
    %vm409 = vmor %vm407, %vm408
    %v410 = vsel %vm409, %v402, %v406
    %v411 = vand.u32 2147483647, %v401
    %vm412 = vcmp.eq.f32.partialorder %v411, 8.507059e+37
    %v413 = vand.u32 %v401, 2147483648
    %v414 = vor.u32 1.1754944e-38, %v413
    %v415 = vsel %vm412, %v414, %v410
    %v416 = vmul.f32 1.0, %v415
    %v417 = vtanh.pop %v377
    %v418 = vxor.u32 %v378, 2147483648
    %v419 = vmul.f32 %v418, 1.442695
    %v420 = vpow.pop %v419
    %v421 = vadd.f32 %v420, 1.0
    %v422 = vrcp.pop %v421
    %v423 = vmul.f32 %v421, %v422
    %v424 = vsub.f32 1.0, %v423
    %v425 = vmul.f32 %v422, %v424
    %v426 = vadd.f32 %v422, %v425
    %vm427 = vweird.f32 %v421
    %vm428 = vweird.f32 %v422
    %vm429 = vmor %vm427, %vm428
    %v430 = vsel %vm429, %v422, %v426
    %v431 = vand.u32 2147483647, %v421
    %vm432 = vcmp.eq.f32.partialorder %v431, 8.507059e+37
    %v433 = vand.u32 %v421, 2147483648
    %v434 = vor.u32 1.1754944e-38, %v433
    %v435 = vsel %vm432, %v434, %v430
    %v436 = vmul.f32 1.0, %v435
    %v437 = vmul.f32 %v416, %v119
    %v438 = vmul.f32 %v397, %v417
    %v439 = vadd.f32 %v437, %v438
    %v440 = vtanh.pop %v439
    %v441 = vmul.f32 %v436, %v440
    %v442 = vld [vmem:[#allocation11] sm:$0xff]
    %v443 = vld [vmem:[#allocation11 + $0x8] sm:$0xff]
    %v444 = vld [vmem:[#allocation11 + $0x10] sm:$0xff]
    %v445 = vld [vmem:[#allocation11 + $0x18] sm:$0xff]
    %v446 = vld [vmem:[#allocation11 + $0x20] sm:$0xff]
    %v447 = vld [vmem:[#allocation11 + $0x28] sm:$0xff]
    %v448 = vld [vmem:[#allocation11 + $0x30] sm:$0xff]
    %v449 = vld [vmem:[#allocation11 + $0x38] sm:$0xff]
    %v450 = vld [vmem:[#allocation11 + $0x40] sm:$0xff]
    %v451 = vld [vmem:[#allocation11 + $0x48] sm:$0xff]
    %v452 = vld [vmem:[#allocation11 + $0x50] sm:$0xff]
    %v453 = vld [vmem:[#allocation11 + $0x58] sm:$0xff]
    %v454 = vld [vmem:[#allocation11 + $0x60] sm:$0xff]
    %v455 = vld [vmem:[#allocation11 + $0x68] sm:$0xff]
    %v456 = vld [vmem:[#allocation11 + $0x70] sm:$0xff]
    %v457 = vld [vmem:[#allocation11 + $0x78] sm:$0xff]
    %v458 = vld [vmem:[%s7] sm:$0x1]
    %v460 = vperm.slane %v458, 0
    %462 = vmatpush.msra.mxu0 %v457
    %463 = vmatpush.msra.mxu0 %v456
    %464 = vmatpush.msra.mxu0 %v455
    %465 = vmatpush.msra.mxu0 %v454
    %466 = vmatpush.msra.mxu0 %v453
    %467 = vmatpush.msra.mxu0 %v452
    %468 = vmatpush.msra.mxu0 %v451
    %469 = vmatpush.msra.mxu0 %v450
    %470 = vmatpush.msra.mxu0 %v449
    %471 = vmatpush.msra.mxu0 %v448
    %472 = vmatpush.msra.mxu0 %v447
    %473 = vmatpush.msra.mxu0 %v446
    %474 = vmatpush.msra.mxu0 %v445
    %475 = vmatpush.msra.mxu0 %v444
    %476 = vmatpush.msra.mxu0 %v443
    %477 = vmatpush.msra.mxu0 %v442
    %478 = vmatmul.f32.gmra.mxu0 %v441
    %v479 = vpop.f32.mrf.mxu0
    %v480 = vadd.f32 %v460, %v479
    %481 = vdwg.mxu0
    %482 = vst [vmem:[#allocation13] sm:$0xff] %v480
    %483 = vst [vmem:[#allocation13 + $0x8] sm:$0xff] %v441
    %484 = vst [vmem:[#allocation13 + $0x10] sm:$0xff] %v439
    // Predicated region
    $region58: #{tpu_custom_call.1} parent=1 // pred_check
      _
    $region59: #{tpu_custom_call.1} parent=1 // pred_check_branch
      %486 = sbr.rel (0) target = $region61
    $region60: #{tpu_custom_call.1} parent=1 // pred_region
      %488 = vsyncadd [#allocation4], 0
      %s490 = sshll.u32 [#allocation13], 4
      %s491 = int_to_ptr.vmem [resolvable:$true] %s490
      %s492 = sshll.u32 %s8, 4
      %s493 = int_to_ptr.hbm [resolvable:$true] %s492
      %495 = dma.vmem_to_hbm [thread:$0]  %s491, 384, %s493, [#allocation4]
    $region61: #{tpu_custom_call.1} parent=1 // pred_fallthru
      _
    // Predicated region
    $region62: #{tpu_custom_call.1} parent=1 // pred_check
      _
    $region63: #{tpu_custom_call.1} parent=1 // pred_check_branch
      %497 = sbr.rel (0) target = $region65
    $region64: #{tpu_custom_call.1} parent=1 // pred_region
      %499 = dma.done [#allocation4], 384
    $region65: #{tpu_custom_call.1} parent=1 // pred_fallthru
      _
    %500 = vsyncpa [#allocation3], 1
    %501 = vsyncpa [#allocation6], 1
    %502 = vsyncpa [#allocation9], 1
    %503 = vsyncpa [#allocation12], 1
    %504 = vsyncpa [#allocation4], 1

</llo_original>
